<compile_context>
chip_gen: v5e
topology: v5e:2x2
jax: 0.10.0
libtpu: 0.0.40
codegen_flags: <defaults>
</compile_context>

<pallas_src>
import functools
import math
from dataclasses import dataclass

import jax
import jax.numpy as jnp
from jax import lax
from jax.experimental import pallas as pl
from jax.experimental.pallas import tpu as pltpu


def _int_pow(x, p):
    """x ** p for a small positive python int p via repeated multiplies (no EUP pow)."""
    acc = None
    base = x
    while p:
        if p & 1:
            acc = base if acc is None else acc * base
        p >>= 1
        if p:
            base = base * base
    return acc


def _norm_pow(dy, dx, power):
    """norm([dy, dx], axis=0) ** power, avoiding unnecessary transcendentals."""
    s = dy * dy + dx * dx
    if power == 2:
        return s                                   # skip sqrt entirely
    if power == 1:
        return jnp.sqrt(s)
    if isinstance(power, int) and power > 0:
        if power % 2 == 0:
            return _int_pow(s, power // 2)
        return _int_pow(s, (power - 1) // 2) * jnp.sqrt(s)
    return jnp.sqrt(s) ** power                    # general (float power) fallback


def _vmem_capacity_bytes():
    """Physical VMEM per TensorCore (128 MiB on v5e/v6e, 64 MiB on v7x)."""
    try:
        return int(pltpu.get_tpu_info().vmem_capacity_bytes)
    except Exception:
        return 64 * 1024 * 1024                    # conservative fallback (v7x)


def _tv_kernel(*refs, power, W, Wg, Hg, G2, multi_plane, has_target):
    """One grid step: sum of |spatial grad|**power over an (R, Wg) row-group tile.

    k = Wg // W consecutive image rows are packed into the lanes of one row group
    (lane-dense for narrow W); Hg is the number of row groups per (n, c) plane.

    refs = (pred_ref, [target_ref], o_ref, [carry_ref])
      pred/target : (R, Wg) tile in the source dtype
      o           : (1, 1, 1) f32 partial sum for this parallel block
      carry       : (1, Wg) f32 last row group of the previous H tile (G2 > 1 only)
    """
    idx = 0
    pred_ref = refs[idx]; idx += 1
    tgt_ref = None
    if has_target:
        tgt_ref = refs[idx]; idx += 1
    o_ref = refs[idx]; idx += 1
    carry_ref = refs[idx] if G2 > 1 else None
    h = pl.program_id(1) if G2 > 1 else None

    x = pred_ref[...].astype(jnp.float32)
    if has_target:
        x = x - tgt_ref[...].astype(jnp.float32)   # diff(pred)-diff(tgt) == diff(pred-tgt)
    R = x.shape[0]
    k_pack = Wg // W

    row = lax.broadcasted_iota(jnp.int32, (R, 1), 0)
    lane = lax.broadcasted_iota(jnp.int32, (1, Wg), 1)
    col_keep = (lane % W) < (W - 1)                # image col W-1 -> dx = 0 (zero pad)
    lane_hi = (lane >= (Wg - W)) if k_pack > 1 else None   # packed sub-row j == k-1

    # Value of the *next image row* at each element (packing-aware).
    cross = (Hg > 1) or (G2 > 1)
    if k_pack > 1:
        nxt = pltpu.roll(x, shift=Wg - W, axis=1)            # next row inside a group
        if cross:
            x_dn = pltpu.roll(x, shift=R - 1, axis=0) if R > 1 else x
            nxt = jnp.where(lane_hi, pltpu.roll(x_dn, shift=Wg - W, axis=1), nxt)
    else:
        nxt = pltpu.roll(x, shift=R - 1, axis=0) if (cross and R > 1) else x

    if multi_plane:
        # Tile holds whole planes: the bottom image row of every plane has dy = 0.
        plast = (row % Hg) == (Hg - 1)
        dy_zero = plast if lane_hi is None else jnp.logical_and(plast, lane_hi)
        dx_keep = col_keep
    else:
        # Tile lives inside one plane (possibly a ragged last H tile).
        if G2 > 1:
            is_last = h == G2 - 1
            vrows = jnp.where(is_last, Hg - (G2 - 1) * R, R)  # plane rows in this tile
            crows = jnp.where(is_last, vrows, R - 1)          # rows counted this step
        else:
            vrows = R
            crows = R
        plast = row == vrows - 1
        dy_zero = jnp.logical_or(
            row >= crows,
            plast if lane_hi is None else jnp.logical_and(plast, lane_hi))
        dx_keep = jnp.logical_and(col_keep, row < crows)

    dy = jnp.where(dy_zero, 0.0, nxt - x)
    dx = jnp.where(dx_keep, pltpu.roll(x, shift=Wg - 1, axis=1) - x, 0.0)
    # TODO(synk): if a v7x / bf16-v6e bundle profile still shows the VALU slot binding,
    # offload this reduction to the idle MXU via jnp.dot(n, ones((Wg, 1), f32)).
    part = jnp.sum(_norm_pow(dy, dx, power))

    if G2 == 1:
        o_ref[...] = jnp.broadcast_to(part, o_ref.shape)
        return

    @pl.when(h == 0)
    def _first():
        o_ref[...] = jnp.broadcast_to(part, o_ref.shape)

    @pl.when(h > 0)
    def _accum():
        # The previous tile's bottom row group was deferred: it needed this tile's
        # first row group for its dy.  Add it now (single o_ref update per step).
        prev = carry_ref[...]
        if k_pack > 1:
            nxt_c = jnp.where(lane_hi,
                              pltpu.roll(x[0:1, :], shift=Wg - W, axis=1),
                              pltpu.roll(prev, shift=Wg - W, axis=1))
        else:
            nxt_c = x[0:1, :]
        dy_c = nxt_c - prev
        dx_c = jnp.where(col_keep, pltpu.roll(prev, shift=Wg - 1, axis=1) - prev, 0.0)
        o_ref[...] = o_ref[...] + jnp.broadcast_to(
            part + jnp.sum(_norm_pow(dy_c, dx_c, power)), o_ref.shape)

    @pl.when(h < G2 - 1)
    def _save():
        carry_ref[...] = x[R - 1:R, :]


@dataclass(frozen=True)
class _Plan:
    mode: str        # "planes": flat 2-D view, several whole planes per block
                     # "perplane": 3-D view, one plane per parallel step (maybe H-split)
    k: int
    Hg: int
    Wg: int
    bb: int = 1
    g1: int = 1
    r: int = 0
    g2: int = 1


def _pick_pack(H, W):
    """Lane-packing factor k: view each group of k image rows as one (k*W)-lane row."""
    if W >= 128 or W < 1:
        return 1
    k = 128 // math.gcd(W, 128)
    if k > 1 and H % k == 0:
        return k
    return 1


def _choose_plan(NC, H, W, itemsize, block_bytes):
    k = _pick_pack(H, W)
    Hg, Wg = H // k, W * k
    plane_bytes = Hg * Wg * itemsize               # == H * W * itemsize

    # (a) Several whole planes per block -> fewest grid steps for small planes,
    #     while keeping G1 >= 2 (preferably even) so both v7x TensorCores get work.
    if plane_bytes <= block_bytes and NC >= 4:
        best = None
        for bb in range(2, NC // 2 + 1):
            if NC % bb or (bb * Hg) % 8 or bb * plane_bytes > block_bytes:
                continue
            g1 = NC // bb
            key = ((g1 % 2) == 0, bb)              # prefer even G1, then bigger blocks
            if best is None or key > best[0]:
                best = (key, bb, g1)
        if best is not None:
            return _Plan("planes", k, Hg, Wg, bb=best[1], g1=best[2])

    # (b) One plane per parallel step; split along H (ragged last tile allowed) when
    #     a single plane does not fit the per-input tile budget.
    max_rows = max(8, (block_bytes // max(Wg * itemsize, 1)) // 8 * 8)
    if plane_bytes <= block_bytes or max_rows >= Hg:
        return _Plan("perplane", k, Hg, Wg, r=Hg, g2=1)
    r = max_rows
    g2 = -(-Hg // r)
    return _Plan("perplane", k, Hg, Wg, r=r, g2=g2)


def tv_loss_pallas(pred, target=None, weight=None, avg_factor=None,
                   dims=(-2, -1), power=1, loss_weight=1.0, block_bytes=None):
    """Pallas implementation of TVLoss.forward (spatial dims, weight=None)."""
    assert tuple(dims) in ((-2, -1), (-1, -2), (2, 3), (3, 2)), \
        "kernel supports spatial dims=(-2,-1)"
    if weight is not None:
        # TODO(synk): dense_weight (per-edge min-weighting) path not implemented in-kernel.
        raise NotImplementedError("dense_weight is not supported")
    # TODO(synk): add a jax.custom_vjp (the TV gradient is a simple stencil) if this
    # loss must be differentiated through for training.

    has_target = target is not None
    if has_target:
        assert target.shape == pred.shape
    N, C, H, W = pred.shape
    NC = N * C
    itemsize = pred.dtype.itemsize
    streams = 2 if has_target else 1

    cap = _vmem_capacity_bytes()
    if block_bytes is None:
        # Large tiles amortise the ~0.35 us per-grid-step cost, but
        # streams x 2 pipeline buffers x tile must stay well inside VMEM
        # (64 MiB/core on v7x, 128 MiB on v5e/v6e).
        block_bytes = max(1 << 20, min(8 << 20, int(cap * 0.55) // (2 * streams)))

    plan = _choose_plan(NC, H, W, itemsize, block_bytes)
    k, Hg, Wg = plan.k, plan.Hg, plan.Wg

    if plan.mode == "planes":
        R, G1, G2 = plan.bb * Hg, plan.g1, 1
        multi_plane = True
        reshape = lambda a: a.reshape(NC * Hg, Wg)
        grid = (G1,)
        in_spec = pl.BlockSpec((R, Wg), lambda i: (i, 0))
        out_spec = pl.BlockSpec((1, 1, 1), lambda i: (i, 0, 0))
        dim_sem = ("parallel",)
        scratch = []
    else:
        R, G1, G2 = plan.r, NC, plan.g2
        multi_plane = False
        reshape = lambda a: a.reshape(NC, Hg, Wg)
        if G2 == 1:
            grid = (NC,)
            in_spec = pl.BlockSpec((None, R, Wg), lambda i: (i, 0, 0))
            out_spec = pl.BlockSpec((1, 1, 1), lambda i: (i, 0, 0))
            dim_sem = ("parallel",)
            scratch = []
        else:
            grid = (NC, G2)
            in_spec = pl.BlockSpec((None, R, Wg), lambda i, h: (i, h, 0))
            out_spec = pl.BlockSpec((1, 1, 1), lambda i, h: (i, 0, 0))
            dim_sem = ("parallel", "arbitrary")
            scratch = [pltpu.VMEM((1, Wg), jnp.float32)]
        # TODO(synk): when NC == 1 on v7x, add a second parallel split (e.g. two
        # 128-aligned column halves) so both TensorCores get work.

    inputs = [reshape(pred)]
    in_specs = [in_spec]
    if has_target:
        inputs.append(reshape(target))
        in_specs.append(in_spec)

    elems = NC * H * W
    needs_sqrt = not (isinstance(power, int) and power > 0 and power % 2 == 0)
    cost = pl.CostEstimate(
        flops=(8 if has_target else 7) * elems,
        transcendentals=elems if needs_sqrt else 0,
        bytes_accessed=streams * elems * itemsize + G1 * 4)

    tile_bytes = R * Wg * itemsize
    need = streams * 2 * tile_bytes + 4 * Wg + (2 << 20)
    vmem_limit = min(max(32 << 20, int(need * 1.25)),
                     max(32 << 20, int(cap * 0.85)))

    kernel = functools.partial(
        _tv_kernel, power=power, W=W, Wg=Wg, Hg=Hg, G2=G2,
        multi_plane=multi_plane, has_target=has_target)

    partials = pl.pallas_call(
        kernel,
        out_shape=jax.ShapeDtypeStruct((G1, 1, 1), jnp.float32),
        grid=grid,
        in_specs=in_specs,
        out_specs=out_spec,
        scratch_shapes=scratch,
        compiler_params=pltpu.CompilerParams(
            dimension_semantics=dim_sem,
            vmem_limit_bytes=vmem_limit),
        cost_estimate=cost,
    )(*inputs)

    total = jnp.sum(partials)              # sum of |grad|**power over every pixel
    per_plane_mean_sum = total / (H * W)   # == tv_loss(...).mean(dims).sum() over (N, C)
    if avg_factor is None:
        loss = per_plane_mean_sum / NC     # @weighted_loss reduction='mean'
    else:
        loss = per_plane_mean_sum / avg_factor
    return loss * loss_weight


class TVLossPallas:
    """Mirror of the PyTorch TVLoss module (no learnable parameters)."""

    def __init__(self, dims=(-2, -1), power=1, loss_weight=1.0):
        self.dims = tuple(dims)
        self.power = power
        self.loss_weight = loss_weight

    def __call__(self, pred, target=None, weight=None, avg_factor=None):
        return tv_loss_pallas(pred, target=target, weight=weight,
                              avg_factor=avg_factor, dims=self.dims,
                              power=self.power, loss_weight=self.loss_weight)


def _tv_loss_reference(pred, target=None, dims=(-2, -1), power=1, loss_weight=1.0):
    """Pure-JAX reference matching the PyTorch tv_loss (weight=None, reduction='mean')."""
    x = pred if target is None else pred - target
    x = x.astype(jnp.float32)
    diffs = []
    for d in dims:
        dd = jnp.diff(x, axis=d)
        pad = [(0, 0)] * x.ndim
        pad[d] = (0, 1)
        diffs.append(jnp.pad(dd, pad))
    dl = jnp.stack(diffs, axis=0)
    n = jnp.sqrt(jnp.sum(dl * dl, axis=0)) ** power
    per_nc = jnp.mean(n, axis=dims)
    return jnp.mean(per_nc) * loss_weight


if __name__ == "__main__":
    key = jax.random.PRNGKey(0)
    k1, k2, k3, k4, k5 = jax.random.split(key, 5)

    pred = jax.random.normal(k1, (2, 4, 16, 16), dtype=jnp.float32)
    target = jax.random.normal(k2, (2, 4, 16, 16), dtype=jnp.float32)

    mod = TVLossPallas(dims=(-2, -1), power=1, loss_weight=1.0)

    # pred-only path (lane-packed W=16, multi-plane blocks, G1=2 parallel steps)
    out = jax.block_until_ready(mod(pred))
    ref = _tv_loss_reference(pred)
    assert jnp.allclose(out, ref, rtol=1e-5, atol=1e-5), (out, ref)

    # fused pred - target path
    out_t = jax.block_until_ready(mod(pred, target=target))
    ref_t = _tv_loss_reference(pred, target=target)
    assert jnp.allclose(out_t, ref_t, rtol=1e-5, atol=1e-5), (out_t, ref_t)

    # bf16 inputs: DMA in source dtype, upcast + subtract fused in-kernel
    pred_bf = pred.astype(jnp.bfloat16)
    tgt_bf = target.astype(jnp.bfloat16)
    out_bf = jax.block_until_ready(mod(pred_bf, target=tgt_bf))
    ref_bf = _tv_loss_reference(pred_bf.astype(jnp.float32),
                                target=tgt_bf.astype(jnp.float32))
    assert jnp.allclose(out_bf, ref_bf, rtol=1e-5, atol=1e-5), (out_bf, ref_bf)

    # power=2 path (no sqrt in-kernel)
    mod2 = TVLossPallas(dims=(-2, -1), power=2, loss_weight=0.5)
    out2 = jax.block_until_ready(mod2(pred, target=target))
    ref2 = _tv_loss_reference(pred, target=target, power=2, loss_weight=0.5)
    assert jnp.allclose(out2, ref2, rtol=1e-5, atol=1e-5), (out2, ref2)

    # one-plane-per-step path (NC=3 has no >=2 x >=2 block split), lane-packed W=48
    pred_b = jax.random.normal(k3, (1, 3, 64, 48), dtype=jnp.float32)
    out_b = jax.block_until_ready(tv_loss_pallas(pred_b))
    ref_b = _tv_loss_reference(pred_b)
    assert jnp.allclose(out_b, ref_b, rtol=1e-5, atol=1e-5), (out_b, ref_b)

    # H-split (carry) path: force a small tile budget so planes split along H
    pred_big = jax.random.normal(k4, (1, 2, 64, 128), dtype=jnp.float32)
    out_big = jax.block_until_ready(tv_loss_pallas(pred_big, block_bytes=16 * 1024))
    ref_big = _tv_loss_reference(pred_big)
    assert jnp.allclose(out_big, ref_big, rtol=1e-5, atol=1e-5), (out_big, ref_big)

    # Ragged H-split: H=100 not divisible by the 16-row tile (masked remainder tile)
    pred_rag = jax.random.normal(k5, (1, 1, 100, 256), dtype=jnp.float32)
    out_rag = jax.block_until_ready(tv_loss_pallas(pred_rag, block_bytes=16 * 1024))
    ref_rag = _tv_loss_reference(pred_rag)
    assert jnp.allclose(out_rag, ref_rag, rtol=1e-5, atol=1e-5), (out_rag, ref_rag)

    # avg_factor path (reduction = sum / avg_factor)
    out_af = jax.block_until_ready(mod(pred, avg_factor=4.0))
    ref_af = _tv_loss_reference(pred) * (pred.shape[0] * pred.shape[1]) / 4.0
    assert jnp.allclose(out_af, ref_af, rtol=1e-5, atol=1e-5), (out_af, ref_af)

    print("KERNEL_OK")
</pallas_src>

<mosaic_0001>
module attributes {stable_mosaic.version = 11 : i64} {
  func.func @_tv_kernel(%arg0: i32, %arg1: memref<8x128xf32, #tpu.memory_space<vmem>>, %arg2: memref<1x1x1xf32, #tpu.memory_space<vmem>>) attributes {dimension_semantics = [#tpu.dimension_semantics<parallel>], iteration_bounds = array<i64: 2>, scalar_prefetch = 0 : i64, scratch_operands = 0 : i64, tpu.core_type = #tpu.core_type<tc>, window_params = [{transform_indices = @transform_0, window_bounds = array<i64: 8, 128>}, {transform_indices = @transform_1, window_bounds = array<i64: 1, 1, 1>}]} {
    %c0 = arith.constant 0 : index
    %c0_0 = arith.constant 0 : index
    %0 = vector.load %arg1[%c0, %c0_0] : memref<8x128xf32, #tpu.memory_space<vmem>>, vector<8x128xf32>
    %1 = tpu.iota {dimensions = array<i32: 0>} : vector<8x1xi32>
    %2 = tpu.iota {dimensions = array<i32: 1>} : vector<1x128xi32>
    %c16_i32 = arith.constant 16 : i32
    %c0_i32 = arith.constant 0 : i32
    %3 = arith.cmpi eq, %c16_i32, %c0_i32 : i32
    %c1_i32 = arith.constant 1 : i32
    %4 = arith.select %3, %c1_i32, %c16_i32 : i32
    %5 = vector.broadcast %4 : i32 to vector<1x128xi32>
    %6 = arith.remsi %2, %5 : vector<1x128xi32>
    %c0_i32_1 = arith.constant 0 : i32
    %7 = vector.broadcast %c0_i32_1 : i32 to vector<1x128xi32>
    %8 = arith.cmpi ne, %6, %7 : vector<1x128xi32>
    %c0_i32_2 = arith.constant 0 : i32
    %9 = vector.broadcast %c0_i32_2 : i32 to vector<1x128xi32>
    %10 = arith.cmpi slt, %6, %9 : vector<1x128xi32>
    %c0_i32_3 = arith.constant 0 : i32
    %11 = arith.cmpi slt, %4, %c0_i32_3 : i32
    %12 = vector.broadcast %11 : i1 to vector<1x128xi1>
    %13 = vector.broadcast %12 : vector<1x128xi1> to vector<1x128xi1>
    %14 = arith.xori %10, %13 : vector<1x128xi1>
    %15 = arith.andi %14, %8 : vector<1x128xi1>
    %16 = vector.broadcast %4 : i32 to vector<1x128xi32>
    %17 = arith.addi %6, %16 : vector<1x128xi32>
    %18 = arith.select %15, %17, %6 : vector<1x128xi1>, vector<1x128xi32>
    %c15_i32 = arith.constant 15 : i32
    %19 = vector.broadcast %c15_i32 : i32 to vector<1x128xi32>
    %20 = arith.cmpi slt, %18, %19 : vector<1x128xi32>
    %c112_i32 = arith.constant 112 : i32
    %21 = vector.broadcast %c112_i32 : i32 to vector<1x128xi32>
    %22 = arith.cmpi sge, %2, %21 : vector<1x128xi32>
    %c112_i32_4 = arith.constant 112 : i32
    %23 = tpu.dynamic_rotate %0 by %c112_i32_4 dim 1 : vector<8x128xf32>, i32 -> vector<8x128xf32>
    %c7_i32 = arith.constant 7 : i32
    %24 = tpu.dynamic_rotate %0 by %c7_i32 dim 0 : vector<8x128xf32>, i32 -> vector<8x128xf32>
    %c112_i32_5 = arith.constant 112 : i32
    %25 = tpu.dynamic_rotate %24 by %c112_i32_5 dim 1 : vector<8x128xf32>, i32 -> vector<8x128xf32>
    %26 = vector.shape_cast %22 : vector<1x128xi1> to vector<1x128xi1>
    %27 = vector.broadcast %26 : vector<1x128xi1> to vector<8x128xi1>
    %28 = arith.select %27, %25, %23 : vector<8x128xi1>, vector<8x128xf32>
    %c2_i32 = arith.constant 2 : i32
    %c0_i32_6 = arith.constant 0 : i32
    %29 = arith.cmpi eq, %c2_i32, %c0_i32_6 : i32
    %c1_i32_7 = arith.constant 1 : i32
    %30 = arith.select %29, %c1_i32_7, %c2_i32 : i32
    %31 = vector.broadcast %30 : i32 to vector<8x1xi32>
    %32 = arith.remsi %1, %31 : vector<8x1xi32>
    %c0_i32_8 = arith.constant 0 : i32
    %33 = vector.broadcast %c0_i32_8 : i32 to vector<8x1xi32>
    %34 = arith.cmpi ne, %32, %33 : vector<8x1xi32>
    %c0_i32_9 = arith.constant 0 : i32
    %35 = vector.broadcast %c0_i32_9 : i32 to vector<8x1xi32>
    %36 = arith.cmpi slt, %32, %35 : vector<8x1xi32>
    %c0_i32_10 = arith.constant 0 : i32
    %37 = arith.cmpi slt, %30, %c0_i32_10 : i32
    %38 = vector.broadcast %37 : i1 to vector<8x1xi1>
    %39 = vector.broadcast %38 : vector<8x1xi1> to vector<8x1xi1>
    %40 = arith.xori %36, %39 : vector<8x1xi1>
    %41 = arith.andi %40, %34 : vector<8x1xi1>
    %42 = vector.broadcast %30 : i32 to vector<8x1xi32>
    %43 = arith.addi %32, %42 : vector<8x1xi32>
    %44 = arith.select %41, %43, %32 : vector<8x1xi1>, vector<8x1xi32>
    %c1_i32_11 = arith.constant 1 : i32
    %45 = vector.broadcast %c1_i32_11 : i32 to vector<8x1xi32>
    %46 = arith.cmpi eq, %44, %45 : vector<8x1xi32>
    %47 = vector.broadcast %46 : vector<8x1xi1> to vector<8x128xi1>
    %48 = vector.broadcast %22 : vector<1x128xi1> to vector<8x128xi1>
    %49 = arith.andi %47, %48 : vector<8x128xi1>
    %50 = arith.subf %28, %0 : vector<8x128xf32>
    %cst = arith.constant 0.000000e+00 : f32
    %51 = vector.broadcast %cst : f32 to vector<8x128xf32>
    %52 = arith.select %49, %51, %50 : vector<8x128xi1>, vector<8x128xf32>
    %c127_i32 = arith.constant 127 : i32
    %53 = tpu.dynamic_rotate %0 by %c127_i32 dim 1 : vector<8x128xf32>, i32 -> vector<8x128xf32>
    %54 = arith.subf %53, %0 : vector<8x128xf32>
    %cst_12 = arith.constant 0.000000e+00 : f32
    %55 = vector.shape_cast %20 : vector<1x128xi1> to vector<1x128xi1>
    %56 = vector.broadcast %55 : vector<1x128xi1> to vector<8x128xi1>
    %57 = vector.broadcast %cst_12 : f32 to vector<8x128xf32>
    %58 = arith.select %56, %54, %57 : vector<8x128xi1>, vector<8x128xf32>
    %59 = arith.mulf %52, %52 : vector<8x128xf32>
    %60 = arith.mulf %58, %58 : vector<8x128xf32>
    %61 = arith.addf %59, %60 : vector<8x128xf32>
    %62 = math.sqrt %61 : vector<8x128xf32>
    %63 = vector.shape_cast %62 : vector<8x128xf32> to vector<1x8x128xf32>
    %cst_13 = arith.constant dense<0.000000e+00> : vector<1xf32>
    %64 = vector.multi_reduction <add>, %63, %cst_13 [1, 2] : vector<1x8x128xf32> to vector<1xf32>
    %65 = vector.shape_cast %64 : vector<1xf32> to vector<1x1x1xf32>
    %66 = vector.extract %65[0, 0, 0] : f32 from vector<1x1x1xf32>
    %67 = vector.broadcast %66 : f32 to vector<1x1x1xf32>
    %c0_14 = arith.constant 0 : index
    %c0_15 = arith.constant 0 : index
    %c0_16 = arith.constant 0 : index
    %68 = vector.load %arg2[%c0_14, %c0_15, %c0_16] : memref<1x1x1xf32, #tpu.memory_space<vmem>>, vector<1x1x1xf32>
    tpu.vector_store %arg2[%c0_14, %c0_15, %c0_16], %67 {strides = array<i32>} : memref<1x1x1xf32, #tpu.memory_space<vmem>>, vector<1x1x1xf32>,
    return
  }
  func.func @transform_0(%arg0: i32) -> (i32, i32) {
    %c0_i32 = arith.constant 0 : i32
    %c0_i32_0 = arith.constant 0 : i32
    return %arg0, %c0_i32 : i32, i32
  }
  func.func @transform_1(%arg0: i32) -> (i32, i32, i32) {
    %c0_i32 = arith.constant 0 : i32
    %c0_i32_0 = arith.constant 0 : i32
    %c0_i32_1 = arith.constant 0 : i32
    return %arg0, %c0_i32, %c0_i32_0 : i32, i32, i32
  }
}

</mosaic_0001>

<llo_original>
// kernel: tpu_custom_call.1
$region0: #{tpu_custom_call.1}
  #allocation0 [shape = 'u32[]', space=smem, size = 0x4, offset = 0x4, fixed_abs, tag = 'smem constant byte address 0x4 - core index']
  #allocation1 [shape = 'u32[72,128]{1,0:T(1,128)}', space=vmem, size = 0x9000, scoped, tag = 'internal scratch']
  %s0 = inlined_call_operand.hbm [shape: f32[16,128], index: 0, kind: input, shape index: {}]
  %s1 = inlined_call_operand.vmem [shape: f32[2,1,1], index: 1, kind: output, shape index: {}]
  %s2 = sld [smem:[#allocation0]]
  $region41: #{tpu_custom_call.1} parent=0
    _
  %s4 = ssub.s32 1, %s2
  %s5 = scalar_select 0, %s4, %s2
  $region1: #{tpu_custom_call.1} parent=0
    #allocation2 [shape = 'u8[8192]{0}', space=vmem, size = 0x2000, scoped, tag = 'input window, operand 0']
    #allocation3 [shape = 's32[2]{0}', space=sflag, size = 0x8, scoped, tag = 'scoped memory for tpu_custom_call.1']
    %6 = vsyncpa [#allocation3], 0
    %s7 = scalar_lea.sflag [#allocation3], 1
    %8 = vsyncpa %s7, 0
    loop: start=0, step=1, limit=4
    $region2: #{tpu_custom_call.1} parent=1 // loop_pre_header
      _
    $region3: #{tpu_custom_call.1} parent=1 // loop_header
      %s10 = sphi 0, %s14
      %p11 = scmp.ge.s32.totalorder %s10, 4
      %s20 = sphi 0, %s22
      %s23 = sphi 0, %s20
      %s24 = sphi 0, %s23
      %s40 = sphi 0, %s24
      %s46 = sphi 0, %s48
      %s49 = sphi 0, %s46
      %s50 = sphi 0, %s49
      %s66 = sphi 0, %s50
    $region4: #{tpu_custom_call.1} parent=1 // loop_header_branch
      %13 = sbr.rel (%p11) target = $region8
    $region5: #{tpu_custom_call.1} parent=1 // loop_body
      %s15 = ssub.s32 %s10, 1
      %s16 = ssub.s32 %s10, 2
      %s17 = sadd.s32 %s10, 1
      %s18 = ssub.s32 %s10, %s17
      %p19 = scmp.eq.s32.totalorder %s18, 0
      %s21 = sadd.s32 %s20, 1
      %s22 = scalar_select %p19, %s20, %s21
      %p25 = pneg %p19
      %p26 = scmp.eq.s32.totalorder %s10, 1
      %p27 = por %p25, %p26
      %p28 = scmp.ne.s32.totalorder %s20, %s23
      %p29 = scmp.eq.s32.totalorder %s10, 0
      %p30 = por %p28, %p29
      %p31 = scmp.ne.s32.totalorder %s20, %s23
      %p32 = scmp.eq.s32.totalorder %s15, 1
      %p33 = por %p31, %p32
      %p34 = scmp.ne.s32.totalorder %s23, %s24
      %p35 = scmp.eq.s32.totalorder %s15, 0
      %p36 = por %p34, %p35
      %p37 = scmp.ne.s32.totalorder %s23, %s24
      %p38 = scmp.eq.s32.totalorder %s16, 1
      %p39 = por %p37, %p38
      %p41 = scmp.ne.s32.totalorder %s24, %s40
      %p42 = scmp.eq.s32.totalorder %s16, 0
      %p43 = por %p41, %p42
      %s44 = ssub.s32 %s10, %s17
      %p45 = scmp.eq.s32.totalorder %s44, 0
      %s47 = sadd.s32 %s46, 1
      %s48 = scalar_select %p45, %s46, %s47
      %p51 = pneg %p45
      %p52 = scmp.eq.s32.totalorder %s10, 1
      %p53 = por %p51, %p52
      %p54 = scmp.ne.s32.totalorder %s46, %s49
      %p55 = scmp.eq.s32.totalorder %s10, 0
      %p56 = por %p54, %p55
      %p57 = scmp.ne.s32.totalorder %s46, %s49
      %p58 = scmp.eq.s32.totalorder %s15, 1
      %p59 = por %p57, %p58
      %p60 = scmp.ne.s32.totalorder %s49, %s50
      %p61 = scmp.eq.s32.totalorder %s15, 0
      %p62 = por %p60, %p61
      %p63 = scmp.ne.s32.totalorder %s49, %s50
      %p64 = scmp.eq.s32.totalorder %s16, 1
      %p65 = por %p63, %p64
      %p67 = scmp.ne.s32.totalorder %s50, %s66
      %p68 = scmp.eq.s32.totalorder %s16, 0
      %p69 = por %p67, %p68
      %p70 = scmp.le.s32.totalorder 1, %s10
      %p71 = scmp.lt.s32.totalorder %s10, 3
      %p72 = pnand %p70, %p71
      %p73 = pneg %p72
      // Predicated region
      $region9: #{tpu_custom_call.1} parent=5 // pred_check
        _
      $region10: #{tpu_custom_call.1} parent=5 // pred_check_branch
        %75 = sbr.rel (%p72) target = $region12
      $region11: #{tpu_custom_call.1} parent=5 // pred_region
        %s76 = ssub.s32 %s10, 1
      $region12: #{tpu_custom_call.1} parent=5 // pred_fallthru
        _
      %p77 = scmp.lt.s32.totalorder %s10, 2
      // Predicated region
      $region13: #{tpu_custom_call.1} parent=5 // pred_check
        %p78 = pneg %p77
      $region14: #{tpu_custom_call.1} parent=5 // pred_check_branch
        %80 = sbr.rel (%p78) target = $region16
      $region15: #{tpu_custom_call.1} parent=5 // pred_region
        // Predicated region
        $region17: #{tpu_custom_call.1} parent=15 // pred_check
          %p81 = pneg %p30
        $region18: #{tpu_custom_call.1} parent=15 // pred_check_branch
          %83 = sbr.rel (%p81) target = $region20
        $region19: #{tpu_custom_call.1} parent=15 // pred_region
          %s84 = sand.u32 %s20, 1
          %s85 = scalar_lea.sflag [#allocation3], %s84
          %s86 = sand.u32 %s20, 1
          %s87 = smul.addr %s86, 8
          %s88 = scalar_lea.vmem [#allocation2], %s87
          %90 = vsyncadd %s85, 0
          %s91 = smul.addr %s10, 8
          %s92 = scalar_lea.hbm %s0, %s91
          %s94 = sshll.u32 %s92, 4
          %s95 = int_to_ptr.hbm [resolvable:$true] %s94
          %s96 = sshll.u32 %s88, 4
          %s97 = int_to_ptr.vmem [resolvable:$true] %s96
          %99 = dma.hbm_to_vmem [thread:$0]  %s95, 128, %s97, %s85
        $region20: #{tpu_custom_call.1} parent=15 // pred_fallthru
          _
      $region16: #{tpu_custom_call.1} parent=5 // pred_fallthru
        _
      %p100 = scmp.le.s32.totalorder 1, %s10
      %p101 = scmp.lt.s32.totalorder %s10, 3
      %p102 = pnand %p100, %p101
      %p103 = pneg %p102
      // Predicated region
      $region21: #{tpu_custom_call.1} parent=5 // pred_check
        _
      $region22: #{tpu_custom_call.1} parent=5 // pred_check_branch
        %105 = sbr.rel (%p102) target = $region24
      $region23: #{tpu_custom_call.1} parent=5 // pred_region
        %s106 = ssub.s32 %s10, 1
        %s107 = sand.u32 %s23, 1
        %s108 = scalar_lea.sflag [#allocation3], %s107
        %s109 = sand.u32 %s23, 1
        %s110 = smul.addr %s109, 8
        %s111 = scalar_lea.vmem [#allocation2], %s110
        // Predicated region
        $region25: #{tpu_custom_call.1} parent=23 // pred_check
          %p112 = pneg %p36
        $region26: #{tpu_custom_call.1} parent=23 // pred_check_branch
          %114 = sbr.rel (%p112) target = $region28
        $region27: #{tpu_custom_call.1} parent=23 // pred_region
          %116 = dma.done %s108, 128
        $region28: #{tpu_custom_call.1} parent=23 // pred_fallthru
          _
        %s117 = sand.u32 %s23, 1
        %s118 = scalar_lea.sflag [#allocation3], %s117
        %s119 = sand.u32 %s23, 1
        %s120 = smul.addr %s119, 8
        %s121 = scalar_lea.vmem [#allocation2], %s120
        %p122 = pneg %p36
        %p123 = pneg %p33
        %p124 = pneg %p62
        %p125 = pneg %p59
        %p126 = scmp.lt.s32.totalorder %s15, 1
        %s127 = scalar_select %p126, %s15, 1
        %s128 = scalar_lea.vmem %s1, %s127
        %p129 = scmp.lt.s32.totalorder %s15, 1
        %s130 = scalar_select %p129, %s15, 1
        %s131 = scalar_lea.vmem %s1, %s130
        %v132 = vld [vmem:[%s111] sm:$0xff]
        %v133 = vlaneseq
        %v134 = vshrl.u32 %v133, 7
        %v135 = vlaneseq
        %v136 = vand.u32 %v135, 127
        %vm137 = vcmp.lt.s32.totalorder %v136, 0
        %v138 = vsub.s32 0, %v136
        %v139 = vsel %vm137, %v138, %v136
        %v140 = vshrl.u32 %v139, 4
        %v141 = vand.u32 %v139, 15
        %v142 = vsub.s32 0, %v141
        %v143 = vsel %vm137, %v142, %v141
        %vm144 = vcmp.ne.s32.totalorder %v143, 0
        %vm145 = vcmp.lt.s32.totalorder %v143, 0
        %vm146 = vmand %vm145, %vm144
        %v147 = vadd.s32 %v143, 16
        %v148 = vsel %vm146, %v147, %v143
        %vm149 = vcmp.lt.s32.totalorder %v148, 15
        %vm150 = vcmp.ge.s32.totalorder %v136, 112
        %151 = vrot.lane.b32.xlu0 %v132, 112
        %v152 = vpop.permute.xlu0 %151
        %v153 = vrot.slane %v132, 1
        %154 = vrot.lane.b32.xlu0 %v153, 112
        %v155 = vpop.permute.xlu0 %154
        %v156 = vsel %vm150, 1, 0
        %vm157 = vcmp.eq.s32.totalorder %v156, 1
        %v158 = vsel %vm157, %v155, %v152
        %vm159 = vcmp.lt.s32.totalorder %v134, 0
        %v160 = vsub.s32 0, %v134
        %v161 = vsel %vm159, %v160, %v134
        %v162 = vshrl.u32 %v161, 1
        %v163 = vand.u32 %v161, 1
        %v164 = vsub.s32 0, %v163
        %v165 = vsel %vm159, %v164, %v163
        %vm166 = vcmp.ne.s32.totalorder %v165, 0
        %vm167 = vcmp.lt.s32.totalorder %v165, 0
        %vm168 = vmand %vm167, %vm166
        %v169 = vadd.s32 %v165, 2
        %v170 = vsel %vm168, %v169, %v165
        %vm171 = vcmp.eq.s32.totalorder %v170, 1
        %v172 = vsel %vm171, 1, 0
        %vm173 = vcmp.eq.s32.totalorder %v172, 1
        %vm174 = vmand %vm173, %vm157
        %v175 = vsub.f32 %v158, %v132
        %v176 = vsel %vm174, 0.0, %v175
        %177 = vrot.lane.b32.xlu0 %v132, 127
        %v178 = vpop.permute.xlu0 %177
        %v179 = vsub.f32 %v178, %v132
        %v180 = vsel %vm149, 1, 0
        %vm181 = vcmp.eq.s32.totalorder %v180, 1
        %v182 = vsel %vm181, %v179, 0.0
        %v183 = vmul.f32 %v176, %v176
        %v184 = vmul.f32 %v182, %v182
        %v185 = vadd.f32 %v183, %v184
        %v186 = vrsqrt.pop %v185
        %v187 = vmul.f32 %v186, %v185
        %v188 = vmul.f32 %v187, %v186
        %v189 = vmul.f32 0.5, %v188
        %v190 = vsub.f32 1.5, %v189
        %v191 = vmul.f32 %v186, %v190
        %v192 = vmul.f32 %v185, %v191
        %vm193 = vcmp.eq.f32.partialorder %v185, inf
        %v194 = vsel %vm193, %v185, %v192
        %vm195 = vcmp.eq.f32.partialorder %v185, 0.0
        %v196 = vand.u32 %v185, 2147483648
        %v197 = vsel %vm195, %v196, %v194
        %198 = vadd.xlane.f32.xlu0 %v197
        %v199 = vpop.xlane.xlu0 %198
        %v200 = vrot.slane %v199, 4
        %v201 = vadd.f32 %v199, %v200
        %v202 = vrot.slane %v201, 2
        %v203 = vadd.f32 %v201, %v202
        %v204 = vrot.slane %v203, 1
        %v205 = vadd.f32 %v203, %v204
        %s206 = vtos %v205
        %v207 = vstv %s206
        %vm208 = vcmask 0
        %209 = vst.msk [vmem:[%s131] sm:$0x1] %vm208, %v207
        %p210 = scmp.lt.s32.totalorder %s15, 1
        %s211 = scalar_select %p210, %s15, 1
        %s212 = scalar_lea.vmem %s1, %s211
        // Predicated region
        $region29: #{tpu_custom_call.1} parent=23 // pred_check
          %p213 = pneg %p59
        $region30: #{tpu_custom_call.1} parent=23 // pred_check_branch
          %215 = sbr.rel (%p213) target = $region32
        $region31: #{tpu_custom_call.1} parent=23 // pred_region
          _
        $region32: #{tpu_custom_call.1} parent=23 // pred_fallthru
          _
      $region24: #{tpu_custom_call.1} parent=5 // pred_fallthru
        _
      %p216 = scmp.le.s32.totalorder 2, %s10
      // Predicated region
      $region33: #{tpu_custom_call.1} parent=5 // pred_check
        %p217 = pneg %p216
      $region34: #{tpu_custom_call.1} parent=5 // pred_check_branch
        %219 = sbr.rel (%p217) target = $region36
      $region35: #{tpu_custom_call.1} parent=5 // pred_region
        %s220 = ssub.s32 %s10, 2
        // Predicated region
        $region37: #{tpu_custom_call.1} parent=35 // pred_check
          %p221 = pneg %p65
        $region38: #{tpu_custom_call.1} parent=35 // pred_check_branch
          %223 = sbr.rel (%p221) target = $region40
        $region39: #{tpu_custom_call.1} parent=35 // pred_region
          %p224 = scmp.lt.s32.totalorder %s16, 1
          %s225 = scalar_select %p224, %s16, 1
          %s226 = scalar_lea.vmem %s1, %s225
        $region40: #{tpu_custom_call.1} parent=35 // pred_fallthru
          _
      $region36: #{tpu_custom_call.1} parent=5 // pred_fallthru
        _
    $region6: #{tpu_custom_call.1} parent=1 // loop_footer
      %s14 = sadd.s32 1, %s10
    $region7: #{tpu_custom_call.1} parent=1 // loop_footer_branch
      %9 = sbr.rel target = $region3
    $region8: #{tpu_custom_call.1} parent=1 // loop_exit
      _
    %227 = vsyncpa [#allocation3], 1
    %s228 = scalar_lea.sflag [#allocation3], 1
    %229 = vsyncpa %s228, 1

</llo_original>
